<compile_context>
chip_gen: v7x
topology: tpu7x:2x2x1
jax: 0.10.0
libtpu: 0.0.40
codegen_flags: <defaults>
</compile_context>

<pallas_src>
import functools

import jax
import jax.numpy as jnp
from jax import lax
from jax.experimental import pallas as pl
from jax.experimental.pallas import tpu as pltpu

ALPHA = 0.75
GAMMA = 2.0
EPS = 1e-8


def _focal_loss_kernel(data_ref, out_ref, *, c, alpha, gamma, n_total,
                       tile, chunk, ragged):
    """data_ref: (c+1, tile) f32 -- rows 0..c-1 = logits, row c = labels (float)."""
    n_chunks = tile // chunk
    base = pl.program_id(0) * tile

    def chunk_loss(blk, start):
        width = blk.shape[1]
        logits = blk[:c, :]                                   # (c, W)
        labels = blk[c:c + 1, :].astype(jnp.int32)            # (1, W), exact ids

        # Numerically-stable softmax gather over the class (sublane) axis.
        m = jnp.max(logits, axis=0, keepdims=True)            # (1, W)
        e = jnp.exp(logits - m)                               # (c, W)
        denom = jnp.sum(e, axis=0, keepdims=True)             # (1, W)
        cls_idx = lax.broadcasted_iota(jnp.int32, (c, width), 0)
        pt_num = jnp.sum(jnp.where(cls_idx == labels, e, 0.0),
                         axis=0, keepdims=True)               # (1, W)
        pt = pt_num / denom                                   # row-wise divide

        one_m_pt = 1.0 - pt
        if gamma == 2.0:
            focal = jnp.square(one_m_pt)
        elif float(gamma).is_integer() and gamma >= 0:
            focal = jnp.ones_like(one_m_pt)
            for _ in range(int(gamma)):
                focal = focal * one_m_pt
        else:
            # general float gamma: clamp so pow's log never sees a negative
            focal = jnp.power(jnp.maximum(one_m_pt, 0.0), gamma)

        alpha_t = jnp.where(labels == 1, alpha, 1.0 - alpha)   # (1, W)
        loss = -alpha_t * focal * jnp.log(pt + EPS)            # (1, W)

        if ragged:
            # Zero out-of-range columns (stale VMEM) before reduction.
            col = base + start + lax.broadcasted_iota(jnp.int32, (1, width), 1)
            loss = jnp.where(col < n_total, loss, 0.0)
        return loss

    if n_chunks == 1:
        total = jnp.sum(chunk_loss(data_ref[...], 0))
    else:
        # Big DMA block, small compute chunks: bounds intermediate pressure.
        def body(ci, acc):
            start = pl.multiple_of(ci * chunk, chunk)
            blk = data_ref[:, pl.ds(start, chunk)]
            return acc + chunk_loss(blk, start)

        acc = lax.fori_loop(0, n_chunks, body,
                            jnp.zeros((1, chunk), jnp.float32))
        total = jnp.sum(acc)

    # Partial sum broadcast across this tile's private lane-dense output slab.
    out_ref[...] = jnp.broadcast_to(total, (1, 128)).astype(jnp.float32)


def weighted_focal_loss(logits, labels, class_weights=None,
                        alpha=ALPHA, gamma=GAMMA, *,
                        tile_n=65536, chunk_n=2048):
    """Pallas equivalent of WeightedFocalLoss.forward(logits, labels).

    WARNING: `class_weights` is stored by the PyTorch module but not used in
    its forward(); it is accepted for signature parity and ignored here too.
    """
    del class_weights
    n, c = logits.shape

    # Fold labels in as an extra float row of the lane-dense transposed logits:
    # a single (C+1, N) f32 stream padded to round_up(C+1, 8) sublanes, instead
    # of (C->8) logits plus a (1->8)-padded int32 label stream (2x HBM bytes at
    # C=4).  Also upcasts bf16 logits so they don't pad 4->16 sublanes.
    # TODO(synk): producing logits already in (C, N) layout upstream (or fusing
    # this transpose+concat into the producing matmul) would remove the extra
    # HBM round-trip of this copy.
    combined = jnp.concatenate(
        [logits.astype(jnp.float32).T,
         labels.astype(jnp.float32).reshape(1, n)], axis=0)    # (c+1, n)

    # ---- tile / chunk selection (padding-aware VMEM accounting) -------------
    rows_padded = ((c + 1 + 7) // 8) * 8        # sublane padding of the block
    bytes_per_col = rows_padded * 4             # combined stream is f32
    budget = 20 << 20                           # double-buffered input budget
    vmem_limit = 32 << 20                       # explicit scoped-VMEM limit,
                                                # safe on v5e/v6e/v7x

    chunk = max(128, (min(chunk_n, tile_n) // 128) * 128)
    max_tile = max(chunk, (budget // (2 * bytes_per_col)) // chunk * chunk)
    tile = min(max(chunk, (tile_n // chunk) * chunk), max_tile)

    if n <= chunk:
        # Single block covering everything (block dims == full array dims).
        tile = n
        chunk = n
        grid = 1
        ragged = False
    else:
        # Cap tile so grid >= 2: both v7x TensorCores get work; the one extra
        # ~0.35us grid step is negligible on single-TC v5e/v6e.
        half = ((pl.cdiv(n, 2) + chunk - 1) // chunk) * chunk
        tile = max(chunk, min(tile, half))
        grid = pl.cdiv(n, tile)
        ragged = (n % tile) != 0

    kernel = functools.partial(
        _focal_loss_kernel, c=c, alpha=float(alpha), gamma=float(gamma),
        n_total=n, tile=tile, chunk=chunk, ragged=ragged)

    partials = pl.pallas_call(
        kernel,
        out_shape=jax.ShapeDtypeStruct((1, grid * 128), jnp.float32),
        grid_spec=pltpu.PrefetchScalarGridSpec(
            num_scalar_prefetch=0,
            grid=(grid,),
            in_specs=[pl.BlockSpec((c + 1, tile), lambda i: (0, i))],
            out_specs=pl.BlockSpec((1, 128), lambda i: (0, i)),
        ),
        compiler_params=pltpu.CompilerParams(
            dimension_semantics=("parallel",),
            vmem_limit_bytes=vmem_limit),
    )(combined)

    # Each tile wrote its partial sum broadcast across a 128-lane slab; take
    # lane 0 of each slab and finish the mean in cheap glue.
    per_tile = partials.reshape(grid, 128)[:, 0]
    return jnp.sum(per_tile) / n


def _reference(logits, labels, alpha=ALPHA, gamma=GAMMA):
    probs = jax.nn.softmax(logits.astype(jnp.float32), axis=1)
    one_hot = jax.nn.one_hot(labels, logits.shape[1], dtype=jnp.float32)
    pt = jnp.sum(probs * one_hot, axis=1)
    alpha_t = jnp.where(labels == 1, alpha, 1.0 - alpha)
    loss = -alpha_t * (1.0 - pt) ** gamma * jnp.log(pt + EPS)
    return loss.mean()


if __name__ == "__main__":
    key = jax.random.PRNGKey(0)
    k1, k2, k3, k4, k5, k6 = jax.random.split(key, 6)

    # Small config consistent with the module: N=16 rows, C=4 classes.
    N, C = 16, 4
    logits = jax.random.normal(k1, (N, C), dtype=jnp.float32)
    labels = jax.random.randint(k2, (N,), 0, C, dtype=jnp.int32)
    class_weights = jnp.ones((C,), dtype=jnp.float32)  # stored, unused in fwd

    out = jax.block_until_ready(weighted_focal_loss(logits, labels, class_weights))
    ref = _reference(logits, labels)
    assert jnp.allclose(out, ref, rtol=1e-5, atol=1e-6), (out, ref)

    # Ragged multi-tile path with inner chunk loop (grid=2, 2 chunks per tile).
    N2 = 300
    logits2 = jax.random.normal(k3, (N2, C), dtype=jnp.float32)
    labels2 = jax.random.randint(k4, (N2,), 0, C, dtype=jnp.int32)
    out2 = jax.block_until_ready(
        weighted_focal_loss(logits2, labels2, class_weights,
                            tile_n=256, chunk_n=128))
    ref2 = _reference(logits2, labels2)
    assert jnp.allclose(out2, ref2, rtol=1e-5, atol=1e-6), (out2, ref2)

    # bf16 logits + different class count (exercises the f32 upcast and a
    # (C+1)=7-row block), single-chunk ragged tiles.
    N3, C3 = 200, 6
    logits3 = jax.random.normal(k5, (N3, C3), dtype=jnp.bfloat16)
    labels3 = jax.random.randint(k6, (N3,), 0, C3, dtype=jnp.int32)
    out3 = jax.block_until_ready(
        weighted_focal_loss(logits3, labels3, None, tile_n=128, chunk_n=128))
    ref3 = _reference(logits3, labels3)
    assert jnp.allclose(out3, ref3, rtol=1e-5, atol=1e-5), (out3, ref3)

    print("KERNEL_OK")
</pallas_src>

<mosaic_0001>
module attributes {stable_mosaic.version = 11 : i64} {
  func.func @_focal_loss_kernel(%arg0: i32, %arg1: memref<5x16xf32, #tpu.memory_space<vmem>>, %arg2: memref<1x128xf32, #tpu.memory_space<vmem>>) attributes {dimension_semantics = [#tpu.dimension_semantics<parallel>], iteration_bounds = array<i64: 1>, scalar_prefetch = 0 : i64, scratch_operands = 0 : i64, tpu.core_type = #tpu.core_type<tc>, window_params = [{transform_indices = @transform_0, window_bounds = array<i64: 5, 16>}, {transform_indices = @transform_1, window_bounds = array<i64: 1, 128>}]} {
    %c0 = arith.constant 0 : index
    %c0_0 = arith.constant 0 : index
    %0 = vector.load %arg1[%c0, %c0_0] : memref<5x16xf32, #tpu.memory_space<vmem>>, vector<5x16xf32>
    %1 = vector.extract_strided_slice %0 {offsets = [0, 0], sizes = [4, 16], strides = [1, 1]} : vector<5x16xf32> to vector<4x16xf32>
    %2 = vector.extract_strided_slice %0 {offsets = [4, 0], sizes = [1, 16], strides = [1, 1]} : vector<5x16xf32> to vector<1x16xf32>
    %3 = arith.fptosi %2 : vector<1x16xf32> to vector<1x16xi32>
    %cst = arith.constant dense<0xFF800000> : vector<16xf32>
    %4 = vector.multi_reduction <maximumf>, %1, %cst [0] : vector<4x16xf32> to vector<16xf32>
    %5 = vector.shape_cast %4 : vector<16xf32> to vector<1x16xf32>
    %6 = vector.broadcast %5 : vector<1x16xf32> to vector<4x16xf32>
    %7 = arith.subf %1, %6 : vector<4x16xf32>
    %8 = math.exp %7 : vector<4x16xf32>
    %cst_1 = arith.constant dense<0.000000e+00> : vector<16xf32>
    %9 = vector.multi_reduction <add>, %8, %cst_1 [0] : vector<4x16xf32> to vector<16xf32>
    %10 = vector.shape_cast %9 : vector<16xf32> to vector<1x16xf32>
    %11 = tpu.iota {dimensions = array<i32: 0>} : vector<4x16xi32>
    %12 = vector.broadcast %3 : vector<1x16xi32> to vector<4x16xi32>
    %13 = arith.cmpi eq, %11, %12 : vector<4x16xi32>
    %cst_2 = arith.constant 0.000000e+00 : f32
    %14 = vector.broadcast %cst_2 : f32 to vector<4x16xf32>
    %15 = arith.select %13, %8, %14 : vector<4x16xi1>, vector<4x16xf32>
    %cst_3 = arith.constant dense<0.000000e+00> : vector<16xf32>
    %16 = vector.multi_reduction <add>, %15, %cst_3 [0] : vector<4x16xf32> to vector<16xf32>
    %17 = vector.shape_cast %16 : vector<16xf32> to vector<1x16xf32>
    %18 = arith.divf %17, %10 : vector<1x16xf32>
    %cst_4 = arith.constant 1.000000e+00 : f32
    %19 = vector.broadcast %cst_4 : f32 to vector<1x16xf32>
    %20 = arith.subf %19, %18 : vector<1x16xf32>
    %21 = arith.mulf %20, %20 : vector<1x16xf32>
    %c1_i32 = arith.constant 1 : i32
    %22 = vector.broadcast %c1_i32 : i32 to vector<1x16xi32>
    %23 = arith.cmpi eq, %3, %22 : vector<1x16xi32>
    %cst_5 = arith.constant 7.500000e-01 : f32
    %cst_6 = arith.constant 2.500000e-01 : f32
    %24 = vector.broadcast %cst_5 : f32 to vector<1x16xf32>
    %25 = vector.broadcast %cst_6 : f32 to vector<1x16xf32>
    %26 = arith.select %23, %24, %25 : vector<1x16xi1>, vector<1x16xf32>
    %cst_7 = arith.constant 0.000000e+00 : f32
    %27 = vector.broadcast %cst_7 : f32 to vector<1x16xf32>
    %28 = arith.subf %27, %26 : vector<1x16xf32>
    %29 = arith.mulf %28, %21 : vector<1x16xf32>
    %cst_8 = arith.constant 9.99999993E-9 : f32
    %30 = vector.broadcast %cst_8 : f32 to vector<1x16xf32>
    %31 = arith.addf %18, %30 : vector<1x16xf32>
    %32 = math.log %31 : vector<1x16xf32>
    %33 = arith.mulf %29, %32 : vector<1x16xf32>
    %34 = vector.shape_cast %33 : vector<1x16xf32> to vector<1x1x16xf32>
    %cst_9 = arith.constant dense<0.000000e+00> : vector<1xf32>
    %35 = vector.multi_reduction <add>, %34, %cst_9 [1, 2] : vector<1x1x16xf32> to vector<1xf32>
    %36 = vector.shape_cast %35 : vector<1xf32> to vector<1x1x1xf32>
    %37 = vector.extract %36[0, 0, 0] : f32 from vector<1x1x1xf32>
    %38 = vector.broadcast %37 : f32 to vector<1x128xf32>
    %c0_10 = arith.constant 0 : index
    %c0_11 = arith.constant 0 : index
    %39 = vector.load %arg2[%c0_10, %c0_11] : memref<1x128xf32, #tpu.memory_space<vmem>>, vector<1x128xf32>
    tpu.vector_store %arg2[%c0_10, %c0_11], %38 {strides = array<i32>} : memref<1x128xf32, #tpu.memory_space<vmem>>, vector<1x128xf32>,
    return
  }
  func.func @transform_0(%arg0: i32) -> (i32, i32) {
    %c0_i32 = arith.constant 0 : i32
    %c0_i32_0 = arith.constant 0 : i32
    return %c0_i32, %arg0 : i32, i32
  }
  func.func @transform_1(%arg0: i32) -> (i32, i32) {
    %c0_i32 = arith.constant 0 : i32
    %c0_i32_0 = arith.constant 0 : i32
    return %c0_i32, %arg0 : i32, i32
  }
}

</mosaic_0001>

<llo_original>
// kernel: tpu_custom_call.1
$region0: #{tpu_custom_call.1}
  #allocation0 [shape = 'u32[]', space=smem, size = 0x4, offset = 0x4, fixed_abs, tag = 'smem constant byte address 0x4 - core index']
  #allocation1 [shape = 'u32[144,128]{1,0:T(1,128)}', space=vmem, size = 0x12000, scoped, tag = 'internal scratch']
  %s0 = inlined_call_operand.hbm [shape: f32[5,16], index: 0, kind: input, shape index: {}]
  %s1 = inlined_call_operand.hbm [shape: f32[1,128], index: 1, kind: output, shape index: {}]
  %s2 = sld [smem:[#allocation0]]
  $region18: #{tpu_custom_call.1} parent=0
    _
  %s4 = ssub.s32 1, %s2
  %s5 = scalar_select 0, %s4, %s2
  $region1: #{tpu_custom_call.1} parent=0
    #allocation2 [shape = 'u8[4096]{0}', space=vmem, size = 0x1000, scoped, tag = 'input window, operand 0, single buffered']
    #allocation3 [shape = 's32[1]{0}', space=sflag, size = 0x4, scoped, tag = 'scoped memory for tpu_custom_call.1']
    #allocation4 [shape = 's32[1]{0}', space=sflag, size = 0x4, scoped, tag = 'scoped memory for tpu_custom_call.1']
    #allocation5 [shape = 'u8[512]{0}', space=vmem, size = 0x400, scoped, tag = 'output window, operand 0, single buffered']
    %6 = vsyncpa [#allocation3], 0
    %7 = vsyncpa [#allocation4], 0
    // Predicated region
    $region2: #{tpu_custom_call.1} parent=1 // pred_check
      _
    $region3: #{tpu_custom_call.1} parent=1 // pred_check_branch
      %9 = sbr.rel (0) target = $region5
    $region4: #{tpu_custom_call.1} parent=1 // pred_region
      %s11 = ssub.s32 128, 128
      %12 = vsyncadd [#allocation3], %s11
      %s14 = sshll.u32 [#allocation2], 4
      %s15 = int_to_ptr.vmem [resolvable:$true] %s14
      %17 = dma.hbm_to_vmem [thread:$0]  %s0, 128, %s15, [#allocation3]
    $region5: #{tpu_custom_call.1} parent=1 // pred_fallthru
      _
    // Predicated region
    $region6: #{tpu_custom_call.1} parent=1 // pred_check
      _
    $region7: #{tpu_custom_call.1} parent=1 // pred_check_branch
      %19 = sbr.rel (0) target = $region9
    $region8: #{tpu_custom_call.1} parent=1 // pred_region
      %20 = dma.done [#allocation3], 128
    $region9: #{tpu_custom_call.1} parent=1 // pred_fallthru
      _
    %v21 = vld [vmem:[#allocation2] sm:$0x1f]
    %v22 = vcvt.f32.s32.to.zero.pseudo %v21
    %vm23 = vcmask 125952
    %v24 = vsel %vm23, %v21, -inf
    %v25 = vrot.slane %v24, 4
    %v26 = vmax.f32 %v24, %v25
    %v27 = vrot.slane %v26, 2
    %v28 = vmax.f32 %v26, %v27
    %v29 = vrot.slane %v28, 1
    %v30 = vmax.f32 %v28, %v29
    %v31 = vsub.f32 %v21, %v30
    %v32 = vmul.f32 %v31, 1.442695
    %v33 = vpow.pop %v32
    %v34 = vsel %vm23, %v33, 0.0
    %v35 = vrot.slane %v34, 4
    %v36 = vadd.f32 %v34, %v35
    %v37 = vrot.slane %v36, 2
    %v38 = vadd.f32 %v36, %v37
    %v39 = vrot.slane %v38, 1
    %v40 = vadd.f32 %v38, %v39
    %v41 = vlaneseq
    %v42 = vshrl.u32 %v41, 7
    %v43 = vlaneseq
    %v44 = vshrl.u32 %v43, 7
    %v45 = vsub.s32 4, %v44
    %v46 = vrot.slane %v22, %v45
    %vm47 = vcmp.eq.s32.totalorder %v42, %v46
    %v48 = vsel %vm47, %v33, 0.0
    %v49 = vsel %vm23, %v48, 0.0
    %v50 = vrot.slane %v49, 4
    %v51 = vadd.f32 %v49, %v50
    %v52 = vrot.slane %v51, 2
    %v53 = vadd.f32 %v51, %v52
    %v54 = vrot.slane %v53, 1
    %v55 = vadd.f32 %v53, %v54
    %v56 = vrcp.pop %v40
    %v57 = vmul.f32 %v55, %v56
    %v58 = vsub.f32 1.0, %v57
    %v59 = vmul.f32 %v58, %v58
    %vm60 = vcmp.eq.s32.totalorder %v22, 1
    %v61 = vsel %vm60, 0.75, 0.25
    %v62 = vsub.f32 0.0, %v61
    %v63 = vmul.f32 %v62, %v59
    %v64 = vadd.f32 %v57, 1e-08
    %v65 = vlog2.pop %v64
    %v66 = vmul.f32 %v65, 0.6931472
    %v67 = vmul.f32 %v63, %v66
    %v69 = vrot.slane %v67, 4
    %vm71 = vcmask 122880
    %v72 = vsel %vm71, %v69, 0.0
    %73 = vadd.xlane.f32.xlu0 %v72
    %v74 = vpop.xlane.xlu0 %73
    %v75 = vrot.slane %v74, 4
    %v76 = vadd.f32 %v74, %v75
    %v77 = vrot.slane %v76, 2
    %v78 = vadd.f32 %v76, %v77
    %v79 = vrot.slane %v78, 1
    %v80 = vadd.f32 %v78, %v79
    %s81 = vtos %v80
    %v82 = vstv %s81
    %83 = vst [vmem:[#allocation5] sm:$0x1] %v82
    // Predicated region
    $region10: #{tpu_custom_call.1} parent=1 // pred_check
      _
    $region11: #{tpu_custom_call.1} parent=1 // pred_check_branch
      %85 = sbr.rel (0) target = $region13
    $region12: #{tpu_custom_call.1} parent=1 // pred_region
      %s87 = ssub.s32 16, 16
      %88 = vsyncadd [#allocation4], %s87
      %s90 = sshll.u32 [#allocation5], 4
      %s91 = int_to_ptr.vmem [resolvable:$true] %s90
      %93 = dma.vmem_to_hbm [thread:$0]  %s91, 16, %s1, [#allocation4]
    $region13: #{tpu_custom_call.1} parent=1 // pred_fallthru
      _
    // Predicated region
    $region14: #{tpu_custom_call.1} parent=1 // pred_check
      _
    $region15: #{tpu_custom_call.1} parent=1 // pred_check_branch
      %95 = sbr.rel (0) target = $region17
    $region16: #{tpu_custom_call.1} parent=1 // pred_region
      %96 = dma.done [#allocation4], 16
    $region17: #{tpu_custom_call.1} parent=1 // pred_fallthru
      _
    %97 = vsyncpa [#allocation3], 1
    %98 = vsyncpa [#allocation4], 1

</llo_original>
